<compile_context>
chip_gen: v7x
topology: tpu7x:2x2x1
jax: 0.10.0
libtpu: 0.0.40
codegen_flags: <defaults>
</compile_context>

<pallas_src>
import functools

import jax
import jax.numpy as jnp
from jax import lax
from jax.experimental import pallas as pl
from jax.experimental.pallas import tpu as pltpu

EPS = 1e-5
_MIB = 1024 * 1024


def _round_up(x, m):
    return ((x + m - 1) // m) * m


def _rel_proj_kernel(x_ref, w_ref, p_ref, o_ref, acc_ref, *,
                     inv_f, n_pad, in_size, tk, mask_k):
    """One (row-tile, k-tile) grid step.

    x_ref:   (tm, tk)     activations (caller dtype)
    w_ref:   (tk, f_pad)  W.T slice (caller dtype), padded feature cols are exact 0
    p_ref:   (3, f_pad)   f32 [bias; gamma; beta], padded lanes are exact 0
    o_ref:   (tm, f_pad)  output tile
    acc_ref: (tm, f_pad)  f32 matmul accumulator (VMEM scratch)
    """
    k = pl.program_id(1)

    @pl.when(k == 0)
    def _init():
        acc_ref[...] = jnp.zeros_like(acc_ref)

    x = x_ref[...]
    w = w_ref[...]
    if mask_k:
        # in_size is not a multiple of tk: the last K block reads past the array and
        # the overrun region holds arbitrary bits (possibly NaN/Inf).  Zero BOTH
        # operands' out-of-range K positions so they contribute exactly 0.
        k0 = k * tk
        xcol = lax.broadcasted_iota(jnp.int32, x.shape, 1) + k0
        x = jnp.where(xcol < in_size, x, jnp.zeros_like(x))
        wrow = lax.broadcasted_iota(jnp.int32, w.shape, 0) + k0
        w = jnp.where(wrow < in_size, w, jnp.zeros_like(w))

    acc_ref[...] += jnp.dot(x, w, preferred_element_type=jnp.float32)

    @pl.when(k == pl.num_programs(1) - 1)
    def _finish():
        p = p_ref[...]
        y = acc_ref[...] + p[0:1, :]               # linear output (f32)
        # Per-row mean over the F valid lanes.  Padded lanes of y are exactly 0
        # (zero weight columns + zero bias), so summing all lanes is exact.
        mean = jnp.sum(y, axis=-1, keepdims=True) * inv_f
        d = y - mean
        # Two-pass (stable) biased variance; each padded lane contributes
        # (0 - mean)^2, removed exactly below.
        sq = jnp.sum(d * d, axis=-1, keepdims=True)
        if n_pad:
            sq = sq - n_pad * (mean * mean)
        var = jnp.maximum(sq * inv_f, 0.0)
        scale = lax.rsqrt(var + EPS) * p[1:2, :]    # fold gamma into the scale (EUP)
        out = d * scale + p[2:3, :]
        o_ref[...] = jnp.maximum(out, 0.0).astype(o_ref.dtype)


def _vmem_limits():
    """Returns (vmem_limit_bytes for Mosaic, working-set budget for our buffers)."""
    phys = 64 * _MIB                       # conservative default (v7x per-core VMEM)
    try:
        phys = int(pltpu.get_tpu_info().vmem_capacity_bytes)
    except Exception:
        pass
    limit = (phys * 5) // 8                # ~80 MiB on v5e/v6e (128), ~40 MiB on v7x (64)
    budget = max(limit - 8 * _MIB, 16 * _MIB)
    return limit, budget


def _choose_tiles(rows, in_size, f_pad, x_isz, w_isz, o_isz,
                  budget, tm_max, single_buffer_w):
    """Pick (tm, tk).  tk == in_size means the weight stays fully resident."""
    rows_r8 = _round_up(max(rows, 1), 8)
    # Target >= 8 row tiles (pipeline overlap + v7x megacore sharding) while keeping
    # tiles >= 256 rows when the problem is large enough.
    tm_pref = min(tm_max, max(256, _round_up(pl.cdiv(rows_r8, 8), 8)), rows_r8)

    params_bytes = 8 * f_pad * 4                      # (3, f_pad) f32, sublane-padded
    per_row_fixed = f_pad * (2 * o_isz + 4)           # 2x out buffers + f32 acc scratch
    w_bufs = 1 if single_buffer_w else 2

    candidates = [t for t in sorted({tm_pref, 512, 256, 128, 64, 32, 16, 8},
                                    reverse=True) if t <= tm_pref]
    for tm in candidates:
        fixed = params_bytes + tm * per_row_fixed
        # (a) keep the whole weight resident: single K step.
        resident = w_bufs * in_size * f_pad * w_isz + 2 * tm * in_size * x_isz
        if fixed + resident <= budget:
            return tm, in_size
        # (b) K-tile: weight and x blocks double-buffered along K.
        avail = budget - fixed
        denom = 2 * f_pad * w_isz + 2 * tm * x_isz
        if avail > 0:
            tk = (avail // denom) // 128 * 128
            if tk >= 128:
                return tm, int(min(tk, _round_up(in_size, 128)))
    # TODO(synk): for extremely wide f_pad also tile the feature dim instead of
    # shrinking tm this far.
    return 8, 128


def relational_projection(x, w, b, gamma, beta, *, tm_max=512, out_dtype=None):
    """x: (B, N, in_size); w: (F, in_size); b/gamma/beta: (F,).  Returns (B, N, F)."""
    B, N, in_size = x.shape
    F = w.shape[0]
    rows = B * N

    out_dt = jnp.dtype(out_dtype) if out_dtype is not None else jnp.dtype(x.dtype)
    f_pad = _round_up(F, 128)               # lane-dense feature dim
    n_pad = f_pad - F
    tm_max = max(8, (int(tm_max) // 8) * 8)

    # Operands: keep x / W in the caller's dtype (bf16 path halves HBM traffic);
    # zero-pad the feature dim so the all-lane statistics stay exact.
    x2 = x.reshape(rows, in_size)
    wt = w.T.astype(x2.dtype)                                   # (in_size, F)
    params = jnp.stack([b, gamma, beta]).astype(jnp.float32)    # (3, F)
    if n_pad:
        wt = jnp.pad(wt, ((0, 0), (0, n_pad)))
        params = jnp.pad(params, ((0, 0), (0, n_pad)))

    x_isz = x2.dtype.itemsize
    w_isz = wt.dtype.itemsize
    o_isz = out_dt.itemsize
    vmem_limit, budget = _vmem_limits()

    cost = pl.CostEstimate(
        flops=2 * rows * in_size * f_pad + 10 * rows * f_pad,
        transcendentals=rows,
        bytes_accessed=(rows * in_size * x_isz + in_size * f_pad * w_isz
                        + 3 * f_pad * 4 + rows * f_pad * o_isz),
    )

    def _launch(single_buffer):
        tm, tk = _choose_tiles(rows, in_size, f_pad, x_isz, w_isz, o_isz,
                               budget, tm_max, single_buffer)
        nk = pl.cdiv(in_size, tk)
        mask_k = (in_size % tk) != 0

        def const_spec(shape):
            index_map = lambda i, k: (0, 0)
            if single_buffer:   # grid-invariant: the 2nd pipeline buffer is pure waste
                return pl.BlockSpec(shape, index_map, pipeline_mode=pl.Buffered(1))
            return pl.BlockSpec(shape, index_map)

        w_spec = (const_spec((tk, f_pad)) if nk == 1
                  else pl.BlockSpec((tk, f_pad), lambda i, k: (k, 0)))

        kernel = functools.partial(
            _rel_proj_kernel, inv_f=1.0 / F, n_pad=n_pad,
            in_size=in_size, tk=tk, mask_k=mask_k)

        return pl.pallas_call(
            kernel,
            out_shape=jax.ShapeDtypeStruct((rows, f_pad), out_dt),
            grid_spec=pltpu.PrefetchScalarGridSpec(
                num_scalar_prefetch=0,
                grid=(pl.cdiv(rows, tm), nk),
                in_specs=[
                    pl.BlockSpec((tm, tk), lambda i, k: (i, k)),
                    w_spec,
                    const_spec((3, f_pad)),
                ],
                out_specs=pl.BlockSpec((tm, f_pad), lambda i, k: (i, 0)),
                scratch_shapes=[pltpu.VMEM((tm, f_pad), jnp.float32)],
            ),
            compiler_params=pltpu.CompilerParams(
                dimension_semantics=("parallel", "arbitrary"),
                vmem_limit_bytes=int(vmem_limit),
            ),
            cost_estimate=cost,
        )(x2, wt, params)

    try:
        out2 = _launch(single_buffer=True)
    except Exception:
        # jax build without BlockSpec.pipeline_mode / Buffered(1) support: identical
        # semantics, just default double buffering for the grid-invariant operands.
        out2 = _launch(single_buffer=False)

    if n_pad:
        out2 = out2[:, :F]
    return out2.reshape(B, N, F)


def _reference(x, w, b, gamma, beta):
    y = jnp.einsum("bni,fi->bnf", x.astype(jnp.float32), w.astype(jnp.float32))
    y = y + b[None, None, :]
    mean = jnp.mean(y, axis=-1, keepdims=True)
    var = jnp.mean((y - mean) ** 2, axis=-1, keepdims=True)
    yn = (y - mean) / jnp.sqrt(var + EPS)
    return jnp.maximum(gamma[None, None, :] * yn + beta[None, None, :], 0.0)


if __name__ == "__main__":
    # Small shapes consistent with the module: x (B, N, in_size)
    B, N, in_size, num_features = 2, 8, 32, 32

    key = jax.random.PRNGKey(0)
    kx, kw, kb = jax.random.split(key, 3)

    x = jax.random.normal(kx, (B, N, in_size), dtype=jnp.float32)

    # Deterministic Linear params (PyTorch-style uniform init bounds)
    bound = 1.0 / (in_size ** 0.5)
    w = jax.random.uniform(kw, (num_features, in_size),
                           minval=-bound, maxval=bound, dtype=jnp.float32)
    b = jax.random.uniform(kb, (num_features,),
                           minval=-bound, maxval=bound, dtype=jnp.float32)

    # gamma = ones, beta = zeros (as in the module)
    gamma = jnp.ones((num_features,), dtype=jnp.float32)
    beta = jnp.zeros((num_features,), dtype=jnp.float32)

    # float32 path (tight tolerance)
    out = jax.block_until_ready(relational_projection(x, w, b, gamma, beta))
    ref = _reference(x, w, b, gamma, beta)
    assert out.shape == (B, N, num_features)
    assert out.dtype == jnp.float32
    assert jnp.allclose(out, ref, atol=1e-4, rtol=1e-4)

    # bfloat16 I/O path (halved HBM traffic); looser tolerance for the bf16 output cast.
    x_bf = x.astype(jnp.bfloat16)
    w_bf = w.astype(jnp.bfloat16)
    out_bf = jax.block_until_ready(relational_projection(x_bf, w_bf, b, gamma, beta))
    ref_bf = _reference(x_bf, w_bf, b, gamma, beta)
    assert out_bf.shape == (B, N, num_features)
    assert out_bf.dtype == jnp.bfloat16
    assert jnp.allclose(out_bf.astype(jnp.float32), ref_bf, atol=3e-2, rtol=3e-2)

    print("KERNEL_OK")
</pallas_src>

<mosaic_0001>
module attributes {stable_mosaic.version = 11 : i64} {
  func.func @_rel_proj_kernel(%arg0: i32, %arg1: i32, %arg2: memref<16x32xf32, #tpu.memory_space<vmem>>, %arg3: memref<32x128xf32, #tpu.memory_space<vmem>>, %arg4: memref<3x128xf32, #tpu.memory_space<vmem>>, %arg5: memref<16x128xf32, #tpu.memory_space<vmem>>, %arg6: memref<16x128xf32, #tpu.memory_space<vmem>>) attributes {dimension_semantics = [#tpu.dimension_semantics<parallel>, #tpu.dimension_semantics<arbitrary>], iteration_bounds = array<i64: 1, 1>, scalar_prefetch = 0 : i64, scratch_operands = 1 : i64, tpu.core_type = #tpu.core_type<tc>, window_params = [{transform_indices = @transform_0, window_bounds = array<i64: 16, 32>}, {pipeline_mode = #tpu.pipeline_mode<synchronous>, transform_indices = @transform_1, window_bounds = array<i64: 32, 128>}, {pipeline_mode = #tpu.pipeline_mode<synchronous>, transform_indices = @transform_2, window_bounds = array<i64: 3, 128>}, {transform_indices = @transform_3, window_bounds = array<i64: 16, 128>}]} {
    %c0_i32 = arith.constant 0 : i32
    %0 = arith.cmpi eq, %arg1, %c0_i32 : i32
    %1 = arith.extui %0 : i1 to i32
    %c0_i32_0 = arith.constant 0 : i32
    %2 = arith.cmpi ne, %1, %c0_i32_0 : i32
    scf.if %2 {
      %cst_10 = arith.constant 0.000000e+00 : f32
      %12 = vector.broadcast %cst_10 : f32 to vector<16x128xf32>
      %c0_11 = arith.constant 0 : index
      %c0_12 = arith.constant 0 : index
      %13 = vector.load %arg6[%c0_11, %c0_12] : memref<16x128xf32, #tpu.memory_space<vmem>>, vector<16x128xf32>
      tpu.vector_store %arg6[%c0_11, %c0_12], %12 {strides = array<i32>} : memref<16x128xf32, #tpu.memory_space<vmem>>, vector<16x128xf32>,
    } else {
    }
    %c0 = arith.constant 0 : index
    %c0_1 = arith.constant 0 : index
    %3 = vector.load %arg2[%c0, %c0_1] : memref<16x32xf32, #tpu.memory_space<vmem>>, vector<16x32xf32>
    %c0_2 = arith.constant 0 : index
    %c0_3 = arith.constant 0 : index
    %4 = vector.load %arg3[%c0_2, %c0_3] : memref<32x128xf32, #tpu.memory_space<vmem>>, vector<32x128xf32>
    %c0_4 = arith.constant 0 : index
    %c0_5 = arith.constant 0 : index
    %5 = vector.load %arg6[%c0_4, %c0_5] : memref<16x128xf32, #tpu.memory_space<vmem>>, vector<16x128xf32>
    %cst = arith.constant dense<0.000000e+00> : vector<16x128xf32>
    %6 = tpu.matmul %3, %4, %cst {dimension_numbers = #tpu.dot_dimension_numbers<[1], [0], [0], [1], [0, 0, 1, 1], [], []>} : vector<16x32xf32>, vector<32x128xf32>, vector<16x128xf32> -> vector<16x128xf32>
    %7 = arith.addf %5, %6 : vector<16x128xf32>
    %c0_6 = arith.constant 0 : index
    %c0_7 = arith.constant 0 : index
    %8 = vector.load %arg6[%c0_6, %c0_7] : memref<16x128xf32, #tpu.memory_space<vmem>>, vector<16x128xf32>
    tpu.vector_store %arg6[%c0_6, %c0_7], %7 {strides = array<i32>} : memref<16x128xf32, #tpu.memory_space<vmem>>, vector<16x128xf32>,
    %c0_i32_8 = arith.constant 0 : i32
    %9 = arith.cmpi eq, %arg1, %c0_i32_8 : i32
    %10 = arith.extui %9 : i1 to i32
    %c0_i32_9 = arith.constant 0 : i32
    %11 = arith.cmpi ne, %10, %c0_i32_9 : i32
    scf.if %11 {
      %c0_10 = arith.constant 0 : index
      %c0_11 = arith.constant 0 : index
      %12 = vector.load %arg4[%c0_10, %c0_11] : memref<3x128xf32, #tpu.memory_space<vmem>>, vector<3x128xf32>
      %c0_12 = arith.constant 0 : index
      %c0_13 = arith.constant 0 : index
      %13 = vector.load %arg6[%c0_12, %c0_13] : memref<16x128xf32, #tpu.memory_space<vmem>>, vector<16x128xf32>
      %14 = vector.extract_strided_slice %12 {offsets = [0, 0], sizes = [1, 128], strides = [1, 1]} : vector<3x128xf32> to vector<1x128xf32>
      %15 = vector.broadcast %14 : vector<1x128xf32> to vector<16x128xf32>
      %16 = arith.addf %13, %15 : vector<16x128xf32>
      %cst_14 = arith.constant dense<0.000000e+00> : vector<16xf32>
      %17 = vector.multi_reduction <add>, %16, %cst_14 [1] : vector<16x128xf32> to vector<16xf32>
      %18 = vector.shape_cast %17 : vector<16xf32> to vector<16x1xf32>
      %cst_15 = arith.constant 3.125000e-02 : f32
      %19 = vector.broadcast %cst_15 : f32 to vector<16x1xf32>
      %20 = arith.mulf %18, %19 : vector<16x1xf32>
      %21 = vector.broadcast %20 : vector<16x1xf32> to vector<16x128xf32>
      %22 = arith.subf %16, %21 : vector<16x128xf32>
      %23 = arith.mulf %22, %22 : vector<16x128xf32>
      %cst_16 = arith.constant dense<0.000000e+00> : vector<16xf32>
      %24 = vector.multi_reduction <add>, %23, %cst_16 [1] : vector<16x128xf32> to vector<16xf32>
      %25 = vector.shape_cast %24 : vector<16xf32> to vector<16x1xf32>
      %26 = arith.mulf %20, %20 : vector<16x1xf32>
      %cst_17 = arith.constant 9.600000e+01 : f32
      %27 = vector.broadcast %cst_17 : f32 to vector<16x1xf32>
      %28 = arith.mulf %27, %26 : vector<16x1xf32>
      %29 = arith.subf %25, %28 : vector<16x1xf32>
      %cst_18 = arith.constant 3.125000e-02 : f32
      %30 = vector.broadcast %cst_18 : f32 to vector<16x1xf32>
      %31 = arith.mulf %29, %30 : vector<16x1xf32>
      %cst_19 = arith.constant 0.000000e+00 : f32
      %32 = vector.broadcast %cst_19 : f32 to vector<16x1xf32>
      %33 = arith.maximumf %31, %32 : vector<16x1xf32>
      %cst_20 = arith.constant 9.99999974E-6 : f32
      %34 = vector.broadcast %cst_20 : f32 to vector<16x1xf32>
      %35 = arith.addf %33, %34 : vector<16x1xf32>
      %36 = math.rsqrt %35 : vector<16x1xf32>
      %37 = vector.extract_strided_slice %12 {offsets = [1, 0], sizes = [1, 128], strides = [1, 1]} : vector<3x128xf32> to vector<1x128xf32>
      %38 = vector.broadcast %36 : vector<16x1xf32> to vector<16x128xf32>
      %39 = vector.broadcast %37 : vector<1x128xf32> to vector<16x128xf32>
      %40 = arith.mulf %38, %39 : vector<16x128xf32>
      %41 = arith.mulf %22, %40 : vector<16x128xf32>
      %42 = vector.extract_strided_slice %12 {offsets = [2, 0], sizes = [1, 128], strides = [1, 1]} : vector<3x128xf32> to vector<1x128xf32>
      %43 = vector.broadcast %42 : vector<1x128xf32> to vector<16x128xf32>
      %44 = arith.addf %41, %43 : vector<16x128xf32>
      %cst_21 = arith.constant 0.000000e+00 : f32
      %45 = vector.broadcast %cst_21 : f32 to vector<16x128xf32>
      %46 = arith.maximumf %44, %45 : vector<16x128xf32>
      %c0_22 = arith.constant 0 : index
      %c0_23 = arith.constant 0 : index
      %47 = vector.load %arg5[%c0_22, %c0_23] : memref<16x128xf32, #tpu.memory_space<vmem>>, vector<16x128xf32>
      tpu.vector_store %arg5[%c0_22, %c0_23], %46 {strides = array<i32>} : memref<16x128xf32, #tpu.memory_space<vmem>>, vector<16x128xf32>,
    } else {
    }
    return
  }
  func.func @transform_0(%arg0: i32, %arg1: i32) -> (i32, i32) {
    %c0_i32 = arith.constant 0 : i32
    return %arg0, %arg1 : i32, i32
  }
  func.func @transform_1(%arg0: i32, %arg1: i32) -> (i32, i32) {
    %c0_i32 = arith.constant 0 : i32
    %c0_i32_0 = arith.constant 0 : i32
    %c0_i32_1 = arith.constant 0 : i32
    return %c0_i32, %c0_i32_0 : i32, i32
  }
  func.func @transform_2(%arg0: i32, %arg1: i32) -> (i32, i32) {
    %c0_i32 = arith.constant 0 : i32
    %c0_i32_0 = arith.constant 0 : i32
    %c0_i32_1 = arith.constant 0 : i32
    return %c0_i32, %c0_i32_0 : i32, i32
  }
  func.func @transform_3(%arg0: i32, %arg1: i32) -> (i32, i32) {
    %c0_i32 = arith.constant 0 : i32
    %c0_i32_0 = arith.constant 0 : i32
    return %arg0, %c0_i32 : i32, i32
  }
}

module attributes {stable_mosaic.version = 11 : i64} {
  func.func @_rel_proj_kernel(%arg0: i32, %arg1: i32, %arg2: memref<16x32xf32, #tpu.memory_space<vmem>>, %arg3: memref<32x128xf32, #tpu.memory_space<vmem>>, %arg4: memref<3x128xf32, #tpu.memory_space<vmem>>, %arg5: memref<16x128xf32, #tpu.memory_space<vmem>>, %arg6: memref<16x128xf32, #tpu.memory_space<vmem>>) attributes {dimension_semantics = [#tpu.dimension_semantics<parallel>, #tpu.dimension_semantics<arbitrary>], iteration_bounds = array<i64: 1, 1>, scalar_prefetch = 0 : i64, scratch_operands = 1 : i64, tpu.core_type = #tpu.core_type<tc>, window_params = [{transform_indices = @transform_0, window_bounds = array<i64: 16, 32>}, {pipeline_mode = #tpu.pipeline_mode<synchronous>, transform_indices = @transform_1, window_bounds = array<i64: 32, 128>}, {pipeline_mode = #tpu.pipeline_mode<synchronous>, transform_indices = @transform_2, window_bounds = array<i64: 3, 128>}, {transform_indices = @transform_3, window_bounds = array<i64: 16, 128>}]} {
    %c0_i32 = arith.constant 0 : i32
    %0 = arith.cmpi eq, %arg1, %c0_i32 : i32
    %1 = arith.extui %0 : i1 to i32
    %c0_i32_0 = arith.constant 0 : i32
    %2 = arith.cmpi ne, %1, %c0_i32_0 : i32
    scf.if %2 {
      %cst_10 = arith.constant 0.000000e+00 : f32
      %12 = vector.broadcast %cst_10 : f32 to vector<16x128xf32>
      %c0_11 = arith.constant 0 : index
      %c0_12 = arith.constant 0 : index
      %13 = vector.load %arg6[%c0_11, %c0_12] : memref<16x128xf32, #tpu.memory_space<vmem>>, vector<16x128xf32>
      tpu.vector_store %arg6[%c0_11, %c0_12], %12 {strides = array<i32>} : memref<16x128xf32, #tpu.memory_space<vmem>>, vector<16x128xf32>,
    } else {
    }
    %c0 = arith.constant 0 : index
    %c0_1 = arith.constant 0 : index
    %3 = vector.load %arg2[%c0, %c0_1] : memref<16x32xf32, #tpu.memory_space<vmem>>, vector<16x32xf32>
    %c0_2 = arith.constant 0 : index
    %c0_3 = arith.constant 0 : index
    %4 = vector.load %arg3[%c0_2, %c0_3] : memref<32x128xf32, #tpu.memory_space<vmem>>, vector<32x128xf32>
    %c0_4 = arith.constant 0 : index
    %c0_5 = arith.constant 0 : index
    %5 = vector.load %arg6[%c0_4, %c0_5] : memref<16x128xf32, #tpu.memory_space<vmem>>, vector<16x128xf32>
    %cst = arith.constant dense<0.000000e+00> : vector<16x128xf32>
    %6 = tpu.matmul %3, %4, %cst {dimension_numbers = #tpu.dot_dimension_numbers<[1], [0], [0], [1], [0, 0, 1, 1], [], []>} : vector<16x32xf32>, vector<32x128xf32>, vector<16x128xf32> -> vector<16x128xf32>
    %7 = arith.addf %5, %6 : vector<16x128xf32>
    %c0_6 = arith.constant 0 : index
    %c0_7 = arith.constant 0 : index
    %8 = vector.load %arg6[%c0_6, %c0_7] : memref<16x128xf32, #tpu.memory_space<vmem>>, vector<16x128xf32>
    tpu.vector_store %arg6[%c0_6, %c0_7], %7 {strides = array<i32>} : memref<16x128xf32, #tpu.memory_space<vmem>>, vector<16x128xf32>,
    %c0_i32_8 = arith.constant 0 : i32
    %9 = arith.cmpi eq, %arg1, %c0_i32_8 : i32
    %10 = arith.extui %9 : i1 to i32
    %c0_i32_9 = arith.constant 0 : i32
    %11 = arith.cmpi ne, %10, %c0_i32_9 : i32
    scf.if %11 {
      %c0_10 = arith.constant 0 : index
      %c0_11 = arith.constant 0 : index
      %12 = vector.load %arg4[%c0_10, %c0_11] : memref<3x128xf32, #tpu.memory_space<vmem>>, vector<3x128xf32>
      %c0_12 = arith.constant 0 : index
      %c0_13 = arith.constant 0 : index
      %13 = vector.load %arg6[%c0_12, %c0_13] : memref<16x128xf32, #tpu.memory_space<vmem>>, vector<16x128xf32>
      %14 = vector.extract_strided_slice %12 {offsets = [0, 0], sizes = [1, 128], strides = [1, 1]} : vector<3x128xf32> to vector<1x128xf32>
      %15 = vector.broadcast %14 : vector<1x128xf32> to vector<16x128xf32>
      %16 = arith.addf %13, %15 : vector<16x128xf32>
      %cst_14 = arith.constant dense<0.000000e+00> : vector<16xf32>
      %17 = vector.multi_reduction <add>, %16, %cst_14 [1] : vector<16x128xf32> to vector<16xf32>
      %18 = vector.shape_cast %17 : vector<16xf32> to vector<16x1xf32>
      %cst_15 = arith.constant 3.125000e-02 : f32
      %19 = vector.broadcast %cst_15 : f32 to vector<16x1xf32>
      %20 = arith.mulf %18, %19 : vector<16x1xf32>
      %21 = vector.broadcast %20 : vector<16x1xf32> to vector<16x128xf32>
      %22 = arith.subf %16, %21 : vector<16x128xf32>
      %23 = arith.mulf %22, %22 : vector<16x128xf32>
      %cst_16 = arith.constant dense<0.000000e+00> : vector<16xf32>
      %24 = vector.multi_reduction <add>, %23, %cst_16 [1] : vector<16x128xf32> to vector<16xf32>
      %25 = vector.shape_cast %24 : vector<16xf32> to vector<16x1xf32>
      %26 = arith.mulf %20, %20 : vector<16x1xf32>
      %cst_17 = arith.constant 9.600000e+01 : f32
      %27 = vector.broadcast %cst_17 : f32 to vector<16x1xf32>
      %28 = arith.mulf %27, %26 : vector<16x1xf32>
      %29 = arith.subf %25, %28 : vector<16x1xf32>
      %cst_18 = arith.constant 3.125000e-02 : f32
      %30 = vector.broadcast %cst_18 : f32 to vector<16x1xf32>
      %31 = arith.mulf %29, %30 : vector<16x1xf32>
      %cst_19 = arith.constant 0.000000e+00 : f32
      %32 = vector.broadcast %cst_19 : f32 to vector<16x1xf32>
      %33 = arith.maximumf %31, %32 : vector<16x1xf32>
      %cst_20 = arith.constant 9.99999974E-6 : f32
      %34 = vector.broadcast %cst_20 : f32 to vector<16x1xf32>
      %35 = arith.addf %33, %34 : vector<16x1xf32>
      %36 = math.rsqrt %35 : vector<16x1xf32>
      %37 = vector.extract_strided_slice %12 {offsets = [1, 0], sizes = [1, 128], strides = [1, 1]} : vector<3x128xf32> to vector<1x128xf32>
      %38 = vector.broadcast %36 : vector<16x1xf32> to vector<16x128xf32>
      %39 = vector.broadcast %37 : vector<1x128xf32> to vector<16x128xf32>
      %40 = arith.mulf %38, %39 : vector<16x128xf32>
      %41 = arith.mulf %22, %40 : vector<16x128xf32>
      %42 = vector.extract_strided_slice %12 {offsets = [2, 0], sizes = [1, 128], strides = [1, 1]} : vector<3x128xf32> to vector<1x128xf32>
      %43 = vector.broadcast %42 : vector<1x128xf32> to vector<16x128xf32>
      %44 = arith.addf %41, %43 : vector<16x128xf32>
      %cst_21 = arith.constant 0.000000e+00 : f32
      %45 = vector.broadcast %cst_21 : f32 to vector<16x128xf32>
      %46 = arith.maximumf %44, %45 : vector<16x128xf32>
      %c0_22 = arith.constant 0 : index
      %c0_23 = arith.constant 0 : index
      %47 = vector.load %arg5[%c0_22, %c0_23] : memref<16x128xf32, #tpu.memory_space<vmem>>, vector<16x128xf32>
      tpu.vector_store %arg5[%c0_22, %c0_23], %46 {strides = array<i32>} : memref<16x128xf32, #tpu.memory_space<vmem>>, vector<16x128xf32>,
    } else {
    }
    return
  }
  func.func @transform_0(%arg0: i32, %arg1: i32) -> (i32, i32) {
    %c0_i32 = arith.constant 0 : i32
    return %arg0, %arg1 : i32, i32
  }
  func.func @transform_1(%arg0: i32, %arg1: i32) -> (i32, i32) {
    %c0_i32 = arith.constant 0 : i32
    %c0_i32_0 = arith.constant 0 : i32
    %c0_i32_1 = arith.constant 0 : i32
    return %c0_i32, %c0_i32_0 : i32, i32
  }
  func.func @transform_2(%arg0: i32, %arg1: i32) -> (i32, i32) {
    %c0_i32 = arith.constant 0 : i32
    %c0_i32_0 = arith.constant 0 : i32
    %c0_i32_1 = arith.constant 0 : i32
    return %c0_i32, %c0_i32_0 : i32, i32
  }
  func.func @transform_3(%arg0: i32, %arg1: i32) -> (i32, i32) {
    %c0_i32 = arith.constant 0 : i32
    %c0_i32_0 = arith.constant 0 : i32
    return %arg0, %c0_i32 : i32, i32
  }
}

</mosaic_0001>

<llo_original>
// kernel: tpu_custom_call.1
$region0: #{tpu_custom_call.1}
  #allocation0 [shape = 'u32[]', space=smem, size = 0x4, offset = 0x4, fixed_abs, tag = 'smem constant byte address 0x4 - core index']
  #allocation1 [shape = 'u32[144,128]{1,0:T(1,128)}', space=vmem, size = 0x12000, scoped, tag = 'internal scratch']
  #allocation2 [shape = 'f32[16,128]{1,0:T(8,128)}', space=vmem, size = 0x2000, scoped, tag = 'scratch operand']
  %s0 = inlined_call_operand.hbm [shape: f32[16,32], index: 0, kind: input, shape index: {}]
  %s1 = inlined_call_operand.hbm [shape: f32[32,128], index: 1, kind: input, shape index: {}]
  %s2 = inlined_call_operand.vmem [shape: f32[3,128], index: 2, kind: input, shape index: {}]
  %s3 = inlined_call_operand.hbm [shape: f32[16,128], index: 3, kind: output, shape index: {}]
  %s4 = sld [smem:[#allocation0]]
  $region38: #{tpu_custom_call.1} parent=0
    _
  %s6 = ssub.s32 1, %s4
  %s7 = scalar_select 0, %s6, %s4
  $region1: #{tpu_custom_call.1} parent=0
    #allocation3 [shape = 'u8[8192]{0}', space=vmem, size = 0x2000, scoped, tag = 'input window, operand 0, single buffered']
    #allocation4 [shape = 's32[1]{0}', space=sflag, size = 0x4, scoped, tag = 'scoped memory for tpu_custom_call.1']
    #allocation5 [shape = 's32[1]{0}', space=sflag, size = 0x4, scoped, tag = 'scoped memory for tpu_custom_call.1']
    #allocation6 [shape = 'u8[16384]{0}', space=vmem, size = 0x4000, scoped, tag = 'input window, operand 1, single buffered']
    #allocation7 [shape = 's32[1]{0}', space=sflag, size = 0x4, scoped, tag = 'scoped memory for tpu_custom_call.1']
    #allocation8 [shape = 'u8[8192]{0}', space=vmem, size = 0x2000, scoped, tag = 'output window, operand 0, single buffered']
    %8 = vsyncpa [#allocation4], 0
    %9 = vsyncpa [#allocation7], 0
    %10 = vsyncpa [#allocation5], 0
    // Predicated region
    $region2: #{tpu_custom_call.1} parent=1 // pred_check
      _
    $region3: #{tpu_custom_call.1} parent=1 // pred_check_branch
      %12 = sbr.rel (0) target = $region5
    $region4: #{tpu_custom_call.1} parent=1 // pred_region
      %s14 = ssub.s32 256, 256
      %15 = vsyncadd [#allocation4], %s14
      %s16 = sshll.u32 [#allocation3], 4
      %s17 = int_to_ptr.vmem [resolvable:$true] %s16
      %22 = dma.hbm_to_vmem [thread:$0]  %s0, 256, %s17, [#allocation4], 128, 128, 8
    $region5: #{tpu_custom_call.1} parent=1 // pred_fallthru
      _
    // Predicated region
    $region6: #{tpu_custom_call.1} parent=1 // pred_check
      _
    $region7: #{tpu_custom_call.1} parent=1 // pred_check_branch
      %24 = sbr.rel (0) target = $region9
    $region8: #{tpu_custom_call.1} parent=1 // pred_region
      %s26 = ssub.s32 512, 512
      %27 = vsyncadd [#allocation7], %s26
      %s28 = sshll.u32 [#allocation6], 4
      %s29 = int_to_ptr.vmem [resolvable:$true] %s28
      %34 = dma.hbm_to_vmem [thread:$0]  %s1, 512, %s29, [#allocation7], 128, 128, 8
    $region9: #{tpu_custom_call.1} parent=1 // pred_fallthru
      _
    // Predicated region
    $region10: #{tpu_custom_call.1} parent=1 // pred_check
      _
    $region11: #{tpu_custom_call.1} parent=1 // pred_check_branch
      %36 = sbr.rel (0) target = $region13
    $region12: #{tpu_custom_call.1} parent=1 // pred_region
      _
    $region13: #{tpu_custom_call.1} parent=1 // pred_fallthru
      _
    // Predicated region
    $region14: #{tpu_custom_call.1} parent=1 // pred_check
      _
    $region15: #{tpu_custom_call.1} parent=1 // pred_check_branch
      %38 = sbr.rel (0) target = $region17
    $region16: #{tpu_custom_call.1} parent=1 // pred_region
      %39 = dma.done [#allocation4], 256
    $region17: #{tpu_custom_call.1} parent=1 // pred_fallthru
      _
    // Predicated region
    $region18: #{tpu_custom_call.1} parent=1 // pred_check
      _
    $region19: #{tpu_custom_call.1} parent=1 // pred_check_branch
      %41 = sbr.rel (0) target = $region21
    $region20: #{tpu_custom_call.1} parent=1 // pred_region
      %42 = dma.done [#allocation7], 512
    $region21: #{tpu_custom_call.1} parent=1 // pred_fallthru
      _
    %p43 = scmp.eq.s32.totalorder 0, 0
    // Predicated region
    $region22: #{tpu_custom_call.1} parent=1 // pred_check
      %p44 = pneg %p43
    $region23: #{tpu_custom_call.1} parent=1 // pred_check_branch
      %46 = sbr.rel (%p44) target = $region25
    $region24: #{tpu_custom_call.1} parent=1 // pred_region
      %47 = vst [vmem:[#allocation2] sm:$0xff] 0.0
      %48 = vst [vmem:[#allocation2 + $0x8] sm:$0xff] 0.0
    $region25: #{tpu_custom_call.1} parent=1 // pred_fallthru
      _
    %v49 = vld [vmem:[#allocation3] sm:$0xff]
    %v50 = vld [vmem:[#allocation3 + $0x8] sm:$0xff]
    %v51 = vld [vmem:[#allocation6] sm:$0xff]
    %v52 = vld [vmem:[#allocation6 + $0x8] sm:$0xff]
    %v53 = vld [vmem:[#allocation6 + $0x10] sm:$0xff]
    %v54 = vld [vmem:[#allocation6 + $0x18] sm:$0xff]
    %v55 = vld [vmem:[#allocation2] sm:$0xff]
    %v56 = vld [vmem:[#allocation2 + $0x8] sm:$0xff]
    %vm57 = vcmask 261120
    %v59 = vsel %vm57, %v49, 0
    %v62 = vsel %vm57, %v50, 0
    %64 = vmatprep.subr.mxu0 0.0
    %65 = vmatpush1.msra.mxu0 %v51
    %66 = vmatprep.subr.mxu0 0.0
    %67 = vmatpush1.msra.mxu0 %v52
    %68 = vmatprep.subr.mxu0 0.0
    %69 = vmatpush1.msra.mxu0 %v53
    %70 = vmatprep.subr.mxu0 0.0
    %71 = vmatpush1.msra.mxu0 %v54
    %72 = vmatprep.subr.mxu0 0.0
    %73 = vmatpush1.msra.mxu0 0.0
    %74 = vmatprep.subr.mxu0 0.0
    %75 = vmatpush1.msra.mxu0 0.0
    %76 = vmatprep.subr.mxu0 0.0
    %77 = vmatpush1.msra.mxu0 0.0
    %78 = vmatprep.subr.mxu0 0.0
    %79 = vmatpush1.msra.mxu0 0.0
    %80 = vmatprep.subr.mxu0 0.0
    %81 = vmatpush1.msra.mxu0 0.0
    %82 = vmatprep.subr.mxu0 0.0
    %83 = vmatpush1.msra.mxu0 0.0
    %84 = vmatprep.subr.mxu0 0.0
    %85 = vmatpush1.msra.mxu0 0.0
    %86 = vmatprep.subr.mxu0 0.0
    %87 = vmatpush1.msra.mxu0 0.0
    %88 = vmatprep.subr.mxu0 0.0
    %89 = vmatpush1.msra.mxu0 0.0
    %90 = vmatprep.subr.mxu0 0.0
    %91 = vmatpush1.msra.mxu0 0.0
    %92 = vmatprep.subr.mxu0 0.0
    %93 = vmatpush1.msra.mxu0 0.0
    %94 = vmatprep.subr.mxu0 0.0
    %95 = vmatpush1.msra.mxu0 0.0
    %96 = vmatprep.subr.mxu0 0.0
    %97 = vmatpush1.msra.mxu0 0.0
    %98 = vmatprep.subr.mxu0 0.0
    %99 = vmatpush1.msra.mxu0 0.0
    %100 = vmatprep.subr.mxu0 0.0
    %101 = vmatpush1.msra.mxu0 0.0
    %102 = vmatprep.subr.mxu0 0.0
    %103 = vmatpush1.msra.mxu0 0.0
    %104 = vmatprep.subr.mxu0 0.0
    %105 = vmatpush1.msra.mxu0 0.0
    %106 = vmatprep.subr.mxu0 0.0
    %107 = vmatpush1.msra.mxu0 0.0
    %108 = vmatprep.subr.mxu0 0.0
    %109 = vmatpush1.msra.mxu0 0.0
    %110 = vmatprep.subr.mxu0 0.0
    %111 = vmatpush1.msra.mxu0 0.0
    %112 = vmatprep.subr.mxu0 0.0
    %113 = vmatpush1.msra.mxu0 0.0
    %114 = vmatprep.subr.mxu0 0.0
    %115 = vmatpush1.msra.mxu0 0.0
    %116 = vmatprep.subr.mxu0 0.0
    %117 = vmatpush1.msra.mxu0 0.0
    %118 = vmatprep.subr.mxu0 0.0
    %119 = vmatpush1.msra.mxu0 0.0
    %120 = vmatprep.subr.mxu0 0.0
    %121 = vmatpush1.msra.mxu0 0.0
    %122 = vmatprep.subr.mxu0 0.0
    %123 = vmatpush1.msra.mxu0 0.0
    %124 = vmatprep.subr.mxu0 0.0
    %125 = vmatpush1.msra.mxu0 0.0
    %126 = vmatprep.subr.mxu0 0.0
    %127 = vmatpush1.msra.mxu0 0.0
    %128 = vmatprep.mubr.f32.mxu0 0.0
    %129 = vmatmul.mubr.f32.gmra.mrb[0].mxu0 %v59
    %v130 = vpop.f32.mrb[0].mxu0
    %v131 = vadd.f32 0.0, %v130
    %v132 = vpop.f32.mrb[0].mxu0
    %133 = vmatprep.mubr.f32.mxu0 0.0
    %134 = vmatmul.mubr.f32.gmra.mrb[0].mxu0 %v62
    %v135 = vpop.f32.mrb[0].mxu0
    %v136 = vadd.f32 0.0, %v135
    %v137 = vpop.f32.mrb[0].mxu0
    %138 = vdwg.mxu0
    %v139 = vadd.f32 %v55, %v131
    %v140 = vadd.f32 %v56, %v136
    %141 = vst [vmem:[#allocation2] sm:$0xff] %v139
    %142 = vst [vmem:[#allocation2 + $0x8] sm:$0xff] %v140
    // Predicated region
    $region26: #{tpu_custom_call.1} parent=1 // pred_check
      %p143 = pneg %p43
    $region27: #{tpu_custom_call.1} parent=1 // pred_check_branch
      %145 = sbr.rel (%p143) target = $region29
    $region28: #{tpu_custom_call.1} parent=1 // pred_region
      %v146 = vld [vmem:[%s2] sm:$0x7]
      %v147 = vld [vmem:[#allocation2] sm:$0xff]
      %v148 = vld [vmem:[#allocation2 + $0x8] sm:$0xff]
      %v149 = vlaneseq
      %v150 = vshrl.u32 %v149, 7
      %v151 = vsub.s32 0, %v150
      %v152 = vrot.slane %v146, %v151
      %v153 = vadd.f32 %v147, %v152
      %v154 = vadd.f32 %v148, %v152
      %155 = vadd.xlane.f32.xlu0 %v153
      %v156 = vpop.xlane.xlu0 %155
      %157 = vadd.xlane.f32.xlu0 %v154
      %v158 = vpop.xlane.xlu0 %157
      %v159 = vmul.f32 %v156, 0.03125
      %v160 = vmul.f32 %v158, 0.03125
      %v161 = vsub.f32 %v153, %v159
      %v162 = vsub.f32 %v154, %v160
      %v163 = vmul.f32 %v161, %v161
      %v164 = vmul.f32 %v162, %v162
      %165 = vadd.xlane.f32.xlu0 %v163
      %v166 = vpop.xlane.xlu0 %165
      %167 = vadd.xlane.f32.xlu0 %v164
      %v168 = vpop.xlane.xlu0 %167
      %v169 = vmul.f32 %v159, %v159
      %v170 = vmul.f32 %v160, %v160
      %v171 = vmul.f32 %v169, 96.0
      %v172 = vmul.f32 %v170, 96.0
      %v173 = vsub.f32 %v166, %v171
      %v174 = vsub.f32 %v168, %v172
      %v175 = vmul.f32 %v173, 0.03125
      %v176 = vmul.f32 %v174, 0.03125
      %v177 = vmax.f32 %v175, 0.0
      %v178 = vmax.f32 %v176, 0.0
      %v179 = vadd.f32 %v177, 1e-05
      %v180 = vadd.f32 %v178, 1e-05
      %v181 = vrsqrt.pop %v179
      %v182 = vrsqrt.pop %v180
      %v183 = vlaneseq
      %v184 = vshrl.u32 %v183, 7
      %v185 = vsub.s32 1, %v184
      %v186 = vrot.slane %v146, %v185
      %v187 = vmul.f32 %v181, %v186
      %v188 = vmul.f32 %v182, %v186
      %v189 = vmul.f32 %v161, %v187
      %v190 = vmul.f32 %v162, %v188
      %v191 = vlaneseq
      %v192 = vshrl.u32 %v191, 7
      %v193 = vsub.s32 2, %v192
      %v194 = vrot.slane %v146, %v193
      %v195 = vadd.f32 %v189, %v194
      %v196 = vadd.f32 %v190, %v194
      %v197 = vmax.f32 %v195, 0.0
      %v198 = vmax.f32 %v196, 0.0
      %199 = vst [vmem:[#allocation8] sm:$0xff] %v197
      %200 = vst [vmem:[#allocation8 + $0x8] sm:$0xff] %v198
    $region29: #{tpu_custom_call.1} parent=1 // pred_fallthru
      _
    // Predicated region
    $region30: #{tpu_custom_call.1} parent=1 // pred_check
      _
    $region31: #{tpu_custom_call.1} parent=1 // pred_check_branch
      %202 = sbr.rel (0) target = $region33
    $region32: #{tpu_custom_call.1} parent=1 // pred_region
      %s204 = ssub.s32 256, 256
      %205 = vsyncadd [#allocation5], %s204
      %s206 = sshll.u32 [#allocation8], 4
      %s207 = int_to_ptr.vmem [resolvable:$true] %s206
      %212 = dma.vmem_to_hbm [thread:$0]  %s207, 256, %s3, [#allocation5], 128, 128, 8
    $region33: #{tpu_custom_call.1} parent=1 // pred_fallthru
      _
    // Predicated region
    $region34: #{tpu_custom_call.1} parent=1 // pred_check
      _
    $region35: #{tpu_custom_call.1} parent=1 // pred_check_branch
      %214 = sbr.rel (0) target = $region37
    $region36: #{tpu_custom_call.1} parent=1 // pred_region
      %215 = dma.done [#allocation5], 256
    $region37: #{tpu_custom_call.1} parent=1 // pred_fallthru
      _
    %216 = vsyncpa [#allocation4], 1
    %217 = vsyncpa [#allocation7], 1
    %218 = vsyncpa [#allocation5], 1

// kernel: tpu_custom_call.1
$region0: #{tpu_custom_call.1}
  #allocation0 [shape = 'u32[]', space=smem, size = 0x4, offset = 0x4, fixed_abs, tag = 'smem constant byte address 0x4 - core index']
  #allocation1 [shape = 'u32[144,128]{1,0:T(1,128)}', space=vmem, size = 0x12000, scoped, tag = 'internal scratch']
  #allocation2 [shape = 'f32[16,128]{1,0:T(8,128)}', space=vmem, size = 0x2000, scoped, tag = 'scratch operand']
  %s0 = inlined_call_operand.hbm [shape: f32[16,32], index: 0, kind: input, shape index: {}]
  %s1 = inlined_call_operand.hbm [shape: f32[32,128], index: 1, kind: input, shape index: {}]
  %s2 = inlined_call_operand.vmem [shape: f32[3,128], index: 2, kind: input, shape index: {}]
  %s3 = inlined_call_operand.hbm [shape: f32[16,128], index: 3, kind: output, shape index: {}]
  %s4 = sld [smem:[#allocation0]]
  $region38: #{tpu_custom_call.1} parent=0
    _
  %s6 = ssub.s32 1, %s4
  %s7 = scalar_select 0, %s6, %s4
  $region1: #{tpu_custom_call.1} parent=0
    #allocation3 [shape = 'u8[8192]{0}', space=vmem, size = 0x2000, scoped, tag = 'input window, operand 0, single buffered']
    #allocation4 [shape = 's32[1]{0}', space=sflag, size = 0x4, scoped, tag = 'scoped memory for tpu_custom_call.1']
    #allocation5 [shape = 's32[1]{0}', space=sflag, size = 0x4, scoped, tag = 'scoped memory for tpu_custom_call.1']
    #allocation6 [shape = 'u8[16384]{0}', space=vmem, size = 0x4000, scoped, tag = 'input window, operand 1, single buffered']
    #allocation7 [shape = 's32[1]{0}', space=sflag, size = 0x4, scoped, tag = 'scoped memory for tpu_custom_call.1']
    #allocation8 [shape = 'u8[8192]{0}', space=vmem, size = 0x2000, scoped, tag = 'output window, operand 0, single buffered']
    %8 = vsyncpa [#allocation4], 0
    %9 = vsyncpa [#allocation7], 0
    %10 = vsyncpa [#allocation5], 0
    // Predicated region
    $region2: #{tpu_custom_call.1} parent=1 // pred_check
      _
    $region3: #{tpu_custom_call.1} parent=1 // pred_check_branch
      %12 = sbr.rel (0) target = $region5
    $region4: #{tpu_custom_call.1} parent=1 // pred_region
      %s14 = ssub.s32 256, 256
      %15 = vsyncadd [#allocation4], %s14
      %s16 = sshll.u32 [#allocation3], 4
      %s17 = int_to_ptr.vmem [resolvable:$true] %s16
      %22 = dma.hbm_to_vmem [thread:$0]  %s0, 256, %s17, [#allocation4], 128, 128, 8
    $region5: #{tpu_custom_call.1} parent=1 // pred_fallthru
      _
    // Predicated region
    $region6: #{tpu_custom_call.1} parent=1 // pred_check
      _
    $region7: #{tpu_custom_call.1} parent=1 // pred_check_branch
      %24 = sbr.rel (0) target = $region9
    $region8: #{tpu_custom_call.1} parent=1 // pred_region
      %s26 = ssub.s32 512, 512
      %27 = vsyncadd [#allocation7], %s26
      %s28 = sshll.u32 [#allocation6], 4
      %s29 = int_to_ptr.vmem [resolvable:$true] %s28
      %34 = dma.hbm_to_vmem [thread:$0]  %s1, 512, %s29, [#allocation7], 128, 128, 8
    $region9: #{tpu_custom_call.1} parent=1 // pred_fallthru
      _
    // Predicated region
    $region10: #{tpu_custom_call.1} parent=1 // pred_check
      _
    $region11: #{tpu_custom_call.1} parent=1 // pred_check_branch
      %36 = sbr.rel (0) target = $region13
    $region12: #{tpu_custom_call.1} parent=1 // pred_region
      _
    $region13: #{tpu_custom_call.1} parent=1 // pred_fallthru
      _
    // Predicated region
    $region14: #{tpu_custom_call.1} parent=1 // pred_check
      _
    $region15: #{tpu_custom_call.1} parent=1 // pred_check_branch
      %38 = sbr.rel (0) target = $region17
    $region16: #{tpu_custom_call.1} parent=1 // pred_region
      %39 = dma.done [#allocation4], 256
    $region17: #{tpu_custom_call.1} parent=1 // pred_fallthru
      _
    // Predicated region
    $region18: #{tpu_custom_call.1} parent=1 // pred_check
      _
    $region19: #{tpu_custom_call.1} parent=1 // pred_check_branch
      %41 = sbr.rel (0) target = $region21
    $region20: #{tpu_custom_call.1} parent=1 // pred_region
      %42 = dma.done [#allocation7], 512
    $region21: #{tpu_custom_call.1} parent=1 // pred_fallthru
      _
    %p43 = scmp.eq.s32.totalorder 0, 0
    // Predicated region
    $region22: #{tpu_custom_call.1} parent=1 // pred_check
      %p44 = pneg %p43
    $region23: #{tpu_custom_call.1} parent=1 // pred_check_branch
      %46 = sbr.rel (%p44) target = $region25
    $region24: #{tpu_custom_call.1} parent=1 // pred_region
      %47 = vst [vmem:[#allocation2] sm:$0xff] 0.0
      %48 = vst [vmem:[#allocation2 + $0x8] sm:$0xff] 0.0
    $region25: #{tpu_custom_call.1} parent=1 // pred_fallthru
      _
    %v49 = vld [vmem:[#allocation3] sm:$0xff]
    %v50 = vld [vmem:[#allocation3 + $0x8] sm:$0xff]
    %v51 = vld [vmem:[#allocation6] sm:$0xff]
    %v52 = vld [vmem:[#allocation6 + $0x8] sm:$0xff]
    %v53 = vld [vmem:[#allocation6 + $0x10] sm:$0xff]
    %v54 = vld [vmem:[#allocation6 + $0x18] sm:$0xff]
    %v55 = vld [vmem:[#allocation2] sm:$0xff]
    %v56 = vld [vmem:[#allocation2 + $0x8] sm:$0xff]
    %vm57 = vcmask 261120
    %v59 = vsel %vm57, %v49, 0
    %v62 = vsel %vm57, %v50, 0
    %64 = vmatprep.subr.mxu0 0.0
    %65 = vmatpush1.msra.mxu0 %v51
    %66 = vmatprep.subr.mxu0 0.0
    %67 = vmatpush1.msra.mxu0 %v52
    %68 = vmatprep.subr.mxu0 0.0
    %69 = vmatpush1.msra.mxu0 %v53
    %70 = vmatprep.subr.mxu0 0.0
    %71 = vmatpush1.msra.mxu0 %v54
    %72 = vmatprep.subr.mxu0 0.0
    %73 = vmatpush1.msra.mxu0 0.0
    %74 = vmatprep.subr.mxu0 0.0
    %75 = vmatpush1.msra.mxu0 0.0
    %76 = vmatprep.subr.mxu0 0.0
    %77 = vmatpush1.msra.mxu0 0.0
    %78 = vmatprep.subr.mxu0 0.0
    %79 = vmatpush1.msra.mxu0 0.0
    %80 = vmatprep.subr.mxu0 0.0
    %81 = vmatpush1.msra.mxu0 0.0
    %82 = vmatprep.subr.mxu0 0.0
    %83 = vmatpush1.msra.mxu0 0.0
    %84 = vmatprep.subr.mxu0 0.0
    %85 = vmatpush1.msra.mxu0 0.0
    %86 = vmatprep.subr.mxu0 0.0
    %87 = vmatpush1.msra.mxu0 0.0
    %88 = vmatprep.subr.mxu0 0.0
    %89 = vmatpush1.msra.mxu0 0.0
    %90 = vmatprep.subr.mxu0 0.0
    %91 = vmatpush1.msra.mxu0 0.0
    %92 = vmatprep.subr.mxu0 0.0
    %93 = vmatpush1.msra.mxu0 0.0
    %94 = vmatprep.subr.mxu0 0.0
    %95 = vmatpush1.msra.mxu0 0.0
    %96 = vmatprep.subr.mxu0 0.0
    %97 = vmatpush1.msra.mxu0 0.0
    %98 = vmatprep.subr.mxu0 0.0
    %99 = vmatpush1.msra.mxu0 0.0
    %100 = vmatprep.subr.mxu0 0.0
    %101 = vmatpush1.msra.mxu0 0.0
    %102 = vmatprep.subr.mxu0 0.0
    %103 = vmatpush1.msra.mxu0 0.0
    %104 = vmatprep.subr.mxu0 0.0
    %105 = vmatpush1.msra.mxu0 0.0
    %106 = vmatprep.subr.mxu0 0.0
    %107 = vmatpush1.msra.mxu0 0.0
    %108 = vmatprep.subr.mxu0 0.0
    %109 = vmatpush1.msra.mxu0 0.0
    %110 = vmatprep.subr.mxu0 0.0
    %111 = vmatpush1.msra.mxu0 0.0
    %112 = vmatprep.subr.mxu0 0.0
    %113 = vmatpush1.msra.mxu0 0.0
    %114 = vmatprep.subr.mxu0 0.0
    %115 = vmatpush1.msra.mxu0 0.0
    %116 = vmatprep.subr.mxu0 0.0
    %117 = vmatpush1.msra.mxu0 0.0
    %118 = vmatprep.subr.mxu0 0.0
    %119 = vmatpush1.msra.mxu0 0.0
    %120 = vmatprep.subr.mxu0 0.0
    %121 = vmatpush1.msra.mxu0 0.0
    %122 = vmatprep.subr.mxu0 0.0
    %123 = vmatpush1.msra.mxu0 0.0
    %124 = vmatprep.subr.mxu0 0.0
    %125 = vmatpush1.msra.mxu0 0.0
    %126 = vmatprep.subr.mxu0 0.0
    %127 = vmatpush1.msra.mxu0 0.0
    %128 = vmatprep.mubr.f32.mxu0 0.0
    %129 = vmatmul.mubr.f32.gmra.mrb[0].mxu0 %v59
    %v130 = vpop.f32.mrb[0].mxu0
    %v131 = vadd.f32 0.0, %v130
    %v132 = vpop.f32.mrb[0].mxu0
    %133 = vmatprep.mubr.f32.mxu0 0.0
    %134 = vmatmul.mubr.f32.gmra.mrb[0].mxu0 %v62
    %v135 = vpop.f32.mrb[0].mxu0
    %v136 = vadd.f32 0.0, %v135
    %v137 = vpop.f32.mrb[0].mxu0
    %138 = vdwg.mxu0
    %v139 = vadd.f32 %v55, %v131
    %v140 = vadd.f32 %v56, %v136
    %141 = vst [vmem:[#allocation2] sm:$0xff] %v139
    %142 = vst [vmem:[#allocation2 + $0x8] sm:$0xff] %v140
    // Predicated region
    $region26: #{tpu_custom_call.1} parent=1 // pred_check
      %p143 = pneg %p43
    $region27: #{tpu_custom_call.1} parent=1 // pred_check_branch
      %145 = sbr.rel (%p143) target = $region29
    $region28: #{tpu_custom_call.1} parent=1 // pred_region
      %v146 = vld [vmem:[%s2] sm:$0x7]
      %v147 = vld [vmem:[#allocation2] sm:$0xff]
      %v148 = vld [vmem:[#allocation2 + $0x8] sm:$0xff]
      %v149 = vlaneseq
      %v150 = vshrl.u32 %v149, 7
      %v151 = vsub.s32 0, %v150
      %v152 = vrot.slane %v146, %v151
      %v153 = vadd.f32 %v147, %v152
      %v154 = vadd.f32 %v148, %v152
      %155 = vadd.xlane.f32.xlu0 %v153
      %v156 = vpop.xlane.xlu0 %155
      %157 = vadd.xlane.f32.xlu0 %v154
      %v158 = vpop.xlane.xlu0 %157
      %v159 = vmul.f32 %v156, 0.03125
      %v160 = vmul.f32 %v158, 0.03125
      %v161 = vsub.f32 %v153, %v159
      %v162 = vsub.f32 %v154, %v160
      %v163 = vmul.f32 %v161, %v161
      %v164 = vmul.f32 %v162, %v162
      %165 = vadd.xlane.f32.xlu0 %v163
      %v166 = vpop.xlane.xlu0 %165
      %167 = vadd.xlane.f32.xlu0 %v164
      %v168 = vpop.xlane.xlu0 %167
      %v169 = vmul.f32 %v159, %v159
      %v170 = vmul.f32 %v160, %v160
      %v171 = vmul.f32 %v169, 96.0
      %v172 = vmul.f32 %v170, 96.0
      %v173 = vsub.f32 %v166, %v171
      %v174 = vsub.f32 %v168, %v172
      %v175 = vmul.f32 %v173, 0.03125
      %v176 = vmul.f32 %v174, 0.03125
      %v177 = vmax.f32 %v175, 0.0
      %v178 = vmax.f32 %v176, 0.0
      %v179 = vadd.f32 %v177, 1e-05
      %v180 = vadd.f32 %v178, 1e-05
      %v181 = vrsqrt.pop %v179
      %v182 = vrsqrt.pop %v180
      %v183 = vlaneseq
      %v184 = vshrl.u32 %v183, 7
      %v185 = vsub.s32 1, %v184
      %v186 = vrot.slane %v146, %v185
      %v187 = vmul.f32 %v181, %v186
      %v188 = vmul.f32 %v182, %v186
      %v189 = vmul.f32 %v161, %v187
      %v190 = vmul.f32 %v162, %v188
      %v191 = vlaneseq
      %v192 = vshrl.u32 %v191, 7
      %v193 = vsub.s32 2, %v192
      %v194 = vrot.slane %v146, %v193
      %v195 = vadd.f32 %v189, %v194
      %v196 = vadd.f32 %v190, %v194
      %v197 = vmax.f32 %v195, 0.0
      %v198 = vmax.f32 %v196, 0.0
      %199 = vst [vmem:[#allocation8] sm:$0xff] %v197
      %200 = vst [vmem:[#allocation8 + $0x8] sm:$0xff] %v198
    $region29: #{tpu_custom_call.1} parent=1 // pred_fallthru
      _
    // Predicated region
    $region30: #{tpu_custom_call.1} parent=1 // pred_check
      _
    $region31: #{tpu_custom_call.1} parent=1 // pred_check_branch
      %202 = sbr.rel (0) target = $region33
    $region32: #{tpu_custom_call.1} parent=1 // pred_region
      %s204 = ssub.s32 256, 256
      %205 = vsyncadd [#allocation5], %s204
      %s206 = sshll.u32 [#allocation8], 4
      %s207 = int_to_ptr.vmem [resolvable:$true] %s206
      %212 = dma.vmem_to_hbm [thread:$0]  %s207, 256, %s3, [#allocation5], 128, 128, 8
    $region33: #{tpu_custom_call.1} parent=1 // pred_fallthru
      _
    // Predicated region
    $region34: #{tpu_custom_call.1} parent=1 // pred_check
      _
    $region35: #{tpu_custom_call.1} parent=1 // pred_check_branch
      %214 = sbr.rel (0) target = $region37
    $region36: #{tpu_custom_call.1} parent=1 // pred_region
      %215 = dma.done [#allocation5], 256
    $region37: #{tpu_custom_call.1} parent=1 // pred_fallthru
      _
    %216 = vsyncpa [#allocation4], 1
    %217 = vsyncpa [#allocation7], 1
    %218 = vsyncpa [#allocation5], 1

</llo_original>
